<compile_context>
chip_gen: v5e
topology: v5e:2x2
jax: 0.10.0
libtpu: 0.0.40
codegen_flags: <defaults>
</compile_context>

<pallas_src>
import numpy as np
import jax
import jax.numpy as jnp
from jax.experimental import pallas as pl
from jax.experimental.pallas import tpu as pltpu


# lax.dot_general dimension numbers contracting the last (H) axis of both
# operands: (1, H) x (S, H) -> (1, S).  Same pattern the TPU flash-attention
# kernel uses for q @ k^T, so it maps onto the MXU without an explicit
# transpose of the (S, H) operand.
_CONTRACT_H = (((1,), (1,)), ((), ()))


def _row_softmax(scores):
    """(1, S) raw scores -> (1, S) softmax over S (exact divide)."""
    m = jnp.max(scores, axis=-1, keepdims=True)
    e = jnp.exp(scores - m)
    return e / jnp.sum(e, axis=-1, keepdims=True)


# ---------------------------------------------------------------------------
# Kernels (grid = (B,); every ref holds the current batch element's block)
# ---------------------------------------------------------------------------
def _dot_kernel(h_ref, enc_ref, out_ref):
    # h_ref: (1, 1, H)   enc_ref: (1, S, H)   out_ref: (1, 1, S)
    h = h_ref[0]                                                   # (1, H)
    enc = enc_ref[0]                                               # (S, H)
    scores = jax.lax.dot_general(h, enc, _CONTRACT_H,
                                 preferred_element_type=jnp.float32)  # (1, S)
    out_ref[0] = _row_softmax(scores).astype(out_ref.dtype)


def _general_kernel(h_ref, enc_ref, w_ref, b_ref, out_ref):
    # h_ref: (1, 1, H)  enc_ref: (1, S, H)  w_ref: (H, H) nn.Linear weight
    # b_ref: (1, H)     out_ref: (1, 1, S)
    #
    # score[s] = sum_j h[j] * (enc[s] @ W.T + b)[j]
    #          = sum_k enc[s, k] * (h @ W)[k] + h.b
    # Folding W into the (1, H) hidden row turns the O(S*H^2) Linear into an
    # O(H^2) matmul plus an O(S*H) contraction; the per-batch constant h.b is
    # kept so the energies match the reference exactly.
    h = h_ref[0]                                                   # (1, H)
    enc = enc_ref[0]                                               # (S, H)
    g = jnp.dot(h, w_ref[...], preferred_element_type=jnp.float32)    # (1, H)
    hb = jnp.sum(h * b_ref[...], axis=1, keepdims=True)               # (1, 1)
    scores = jax.lax.dot_general(g, enc, _CONTRACT_H,
                                 preferred_element_type=jnp.float32) + hb
    out_ref[0] = _row_softmax(scores).astype(out_ref.dtype)


def _concat_kernel(h_ref, enc_ref, wt_ref, bv_ref, out_ref):
    # h_ref: (1, 1, H)  enc_ref: (1, S, H)
    # wt_ref: (2H, H) = W.T of the (2H -> H) Linear; rows [:H] act on hidden,
    #                   rows [H:] act on the encoder outputs.
    # bv_ref: (2, H)    row 0 = Linear bias, row 1 = v.
    H = wt_ref.shape[1]
    h = h_ref[0]                                                   # (1, H)
    enc = enc_ref[0]                                               # (S, H)
    bias = bv_ref[0:1, :]                                          # (1, H)
    v2d = bv_ref[1:2, :]                                           # (1, H)
    e_h = jnp.dot(h, wt_ref[:H, :],
                  preferred_element_type=jnp.float32) + bias       # (1, H)
    e_e = jnp.dot(enc, wt_ref[H:, :],
                  preferred_element_type=jnp.float32)              # (S, H)
    energy = jnp.tanh(e_e + e_h)                                   # (S, H)
    scores = jax.lax.dot_general(v2d, energy, _CONTRACT_H,
                                 preferred_element_type=jnp.float32)  # (1, S)
    out_ref[0] = _row_softmax(scores).astype(out_ref.dtype)


_KERNELS = {"dot": _dot_kernel, "general": _general_kernel, "concat": _concat_kernel}


# ---------------------------------------------------------------------------
# One-time parameter packing (hoisted out of the per-call path)
# ---------------------------------------------------------------------------
def pack_attn_params(method, params):
    if method == "dot":
        return ()
    if method == "general":
        return (params["attn_w"], params["attn_b"].reshape(1, -1))
    if method == "concat":
        wt = params["attn_w"].T                                    # (2H, H)
        bv = jnp.stack([params["attn_b"], params["v"]], axis=0)    # (2, H)
        return (wt, bv)
    raise ValueError(method, "is not an appropriate attention method.")


# ---------------------------------------------------------------------------
# Wrapper
# ---------------------------------------------------------------------------
def attn_forward(method, hidden, encoder_outputs, packed=()):
    """hidden: (1, B, H), encoder_outputs: (S, B, H)  ->  (B, 1, S)."""
    if method not in _KERNELS:
        raise ValueError(method, "is not an appropriate attention method.")
    S, B, H = encoder_outputs.shape

    # One layout change so every grid step consumes a contiguous (S, H) slab
    # (no sublane slicing inside the kernel).  In a real decoder the encoder
    # outputs would be stored batch-major once and reused for every step.
    h3 = jnp.transpose(hidden, (1, 0, 2))                # (B, 1, H)
    enc_b = jnp.transpose(encoder_outputs, (1, 0, 2))    # (B, S, H)

    row_spec = pl.BlockSpec((1, 1, H), lambda b: (b, 0, 0))
    enc_spec = pl.BlockSpec((1, S, H), lambda b: (b, 0, 0))
    out_spec = pl.BlockSpec((1, 1, S), lambda b: (b, 0, 0))
    # All packed parameters are 2-D and identical for every grid step.
    param_specs = [pl.BlockSpec(p.shape, lambda b: (0, 0)) for p in packed]

    return pl.pallas_call(
        _KERNELS[method],
        out_shape=jax.ShapeDtypeStruct((B, 1, S), hidden.dtype),
        grid=(B,),
        in_specs=[row_spec, enc_spec] + param_specs,
        out_specs=out_spec,
        compiler_params=pltpu.CompilerParams(
            # Batch steps are independent -> on v7x the two TensorCores split
            # the grid; no effect on v5e/v6e (single TensorCore).
            dimension_semantics=("parallel",)),
    )(h3, enc_b, *packed)


# ---------------------------------------------------------------------------
# Pure-JAX reference (mirrors the PyTorch module)
# ---------------------------------------------------------------------------
def attn_reference(method, hidden, encoder_outputs, params):
    # The Linear matmuls run at Precision.HIGHEST: XLA:TPU's default f32
    # matmul rounds its operands to bf16 (~2e-3 relative), which previously
    # made a correct kernel look wrong at the comparison tolerance.
    highest = jax.lax.Precision.HIGHEST
    if method == "dot":
        scores = jnp.sum(hidden * encoder_outputs, axis=2)               # (S, B)
    elif method == "general":
        energy = jnp.matmul(encoder_outputs, params["attn_w"].T,
                            precision=highest) + params["attn_b"]
        scores = jnp.sum(hidden * energy, axis=2)
    elif method == "concat":
        hexp = jnp.broadcast_to(hidden, encoder_outputs.shape)
        cat = jnp.concatenate([hexp, encoder_outputs], axis=2)           # (S, B, 2H)
        energy = jnp.tanh(jnp.matmul(cat, params["attn_w"].T,
                                     precision=highest) + params["attn_b"])
        scores = jnp.sum(params["v"] * energy, axis=2)
    else:
        raise ValueError(method)
    scores = scores.T                                                    # (B, S)
    return jax.nn.softmax(scores, axis=1)[:, None, :]                    # (B, 1, S)


# ---------------------------------------------------------------------------
# Main
# ---------------------------------------------------------------------------
if __name__ == "__main__":
    key = jax.random.PRNGKey(0)
    B, S, H = 2, 8, 32   # batch, seq (max_length), hidden_size

    k_h, k_e, k_wg, k_bg, k_wc, k_bc, k_v = jax.random.split(key, 7)
    hidden = jax.random.normal(k_h, (1, B, H), dtype=jnp.float32)
    encoder_outputs = jax.random.normal(k_e, (S, B, H), dtype=jnp.float32)

    # PyTorch-like uniform(-1/sqrt(fan_in), 1/sqrt(fan_in)) init.
    bound_g = 1.0 / np.sqrt(H)
    bound_c = 1.0 / np.sqrt(2 * H)
    params_by_method = {
        "dot": {},
        "general": {
            "attn_w": jax.random.uniform(k_wg, (H, H), jnp.float32, -bound_g, bound_g),
            "attn_b": jax.random.uniform(k_bg, (H,), jnp.float32, -bound_g, bound_g),
        },
        "concat": {
            "attn_w": jax.random.uniform(k_wc, (H, 2 * H), jnp.float32, -bound_c, bound_c),
            "attn_b": jax.random.uniform(k_bc, (H,), jnp.float32, -bound_c, bound_c),
            "v": jax.random.uniform(k_v, (H,), jnp.float32, -1.0, 1.0),
        },
    }

    ok = True
    for method, params in params_by_method.items():
        packed = pack_attn_params(method, params)          # hoisted, once per model
        out = jax.block_until_ready(
            attn_forward(method, hidden, encoder_outputs, packed))
        out = np.asarray(out)
        ref = np.asarray(attn_reference(method, hidden, encoder_outputs, params))

        if out.shape != (B, 1, S):
            ok = False
            print(f"bad shape for method={method}: {out.shape}")
            continue
        # Exact-divide softmax: every row must sum to 1 at f32 accuracy.
        if not np.allclose(out.sum(axis=-1), 1.0, atol=1e-5):
            ok = False
            print(f"rows not normalized for method={method}")
        # Tolerance covers MXU pass-decomposition differences between the
        # Mosaic kernel and the XLA reference matmul paths (bf16-operand
        # rounding worst case is a few e-3 on the attention weights);
        # structural errors show up at >= 1e-1.
        if not np.allclose(out, ref, atol=5e-3, rtol=0.0):
            ok = False
            diff = float(np.max(np.abs(out - ref)))
            print(f"mismatch for method={method}, max_abs_diff={diff}")

    if ok:
        print("KERNEL_OK")
</pallas_src>

<mosaic_0001>
module attributes {stable_mosaic.version = 11 : i64} {
  func.func @_dot_kernel(%arg0: i32, %arg1: memref<1x1x32xf32, #tpu.memory_space<vmem>>, %arg2: memref<1x8x32xf32, #tpu.memory_space<vmem>>, %arg3: memref<1x1x8xf32, #tpu.memory_space<vmem>>) attributes {dimension_semantics = [#tpu.dimension_semantics<parallel>], iteration_bounds = array<i64: 2>, scalar_prefetch = 0 : i64, scratch_operands = 0 : i64, tpu.core_type = #tpu.core_type<tc>, window_params = [{transform_indices = @transform_0, window_bounds = array<i64: 1, 1, 32>}, {transform_indices = @transform_1, window_bounds = array<i64: 1, 8, 32>}, {transform_indices = @transform_2, window_bounds = array<i64: 1, 1, 8>}]} {
    %c0 = arith.constant 0 : index
    %c0_0 = arith.constant 0 : index
    %c0_1 = arith.constant 0 : index
    %0 = vector.load %arg1[%c0, %c0_0, %c0_1] : memref<1x1x32xf32, #tpu.memory_space<vmem>>, vector<1x1x32xf32>
    %1 = vector.shape_cast %0 : vector<1x1x32xf32> to vector<1x32xf32>
    %c0_2 = arith.constant 0 : index
    %c0_3 = arith.constant 0 : index
    %c0_4 = arith.constant 0 : index
    %2 = vector.load %arg2[%c0_2, %c0_3, %c0_4] : memref<1x8x32xf32, #tpu.memory_space<vmem>>, vector<1x8x32xf32>
    %3 = vector.shape_cast %2 : vector<1x8x32xf32> to vector<8x32xf32>
    %cst = arith.constant dense<0.000000e+00> : vector<1x8xf32>
    %4 = tpu.matmul %1, %3, %cst {dimension_numbers = #tpu.dot_dimension_numbers<[1], [1], [0], [0], [0, 0, 1, 0], [], []>} : vector<1x32xf32>, vector<8x32xf32>, vector<1x8xf32> -> vector<1x8xf32>
    %cst_5 = arith.constant dense<0xFF800000> : vector<1xf32>
    %5 = vector.multi_reduction <maximumf>, %4, %cst_5 [1] : vector<1x8xf32> to vector<1xf32>
    %6 = vector.shape_cast %5 : vector<1xf32> to vector<1x1xf32>
    %7 = vector.broadcast %6 : vector<1x1xf32> to vector<1x8xf32>
    %8 = arith.subf %4, %7 : vector<1x8xf32>
    %9 = math.exp %8 : vector<1x8xf32>
    %cst_6 = arith.constant dense<0.000000e+00> : vector<1xf32>
    %10 = vector.multi_reduction <add>, %9, %cst_6 [1] : vector<1x8xf32> to vector<1xf32>
    %11 = vector.shape_cast %10 : vector<1xf32> to vector<1x1xf32>
    %12 = vector.broadcast %11 : vector<1x1xf32> to vector<1x8xf32>
    %13 = arith.divf %9, %12 : vector<1x8xf32>
    %c0_7 = arith.constant 0 : index
    %c0_8 = arith.constant 0 : index
    %c0_9 = arith.constant 0 : index
    %14 = vector.load %arg3[%c0_7, %c0_8, %c0_9] : memref<1x1x8xf32, #tpu.memory_space<vmem>>, vector<1x1x8xf32>
    %15 = vector.shape_cast %14 : vector<1x1x8xf32> to vector<1x8xf32>
    %16 = vector.shape_cast %13 : vector<1x8xf32> to vector<1x1x8xf32>
    tpu.vector_store %arg3[%c0_7, %c0_8, %c0_9], %16 {strides = array<i32>} : memref<1x1x8xf32, #tpu.memory_space<vmem>>, vector<1x1x8xf32>,
    return
  }
  func.func @transform_0(%arg0: i32) -> (i32, i32, i32) {
    %c0_i32 = arith.constant 0 : i32
    %c0_i32_0 = arith.constant 0 : i32
    %c0_i32_1 = arith.constant 0 : i32
    return %arg0, %c0_i32, %c0_i32_0 : i32, i32, i32
  }
  func.func @transform_1(%arg0: i32) -> (i32, i32, i32) {
    %c0_i32 = arith.constant 0 : i32
    %c0_i32_0 = arith.constant 0 : i32
    %c0_i32_1 = arith.constant 0 : i32
    return %arg0, %c0_i32, %c0_i32_0 : i32, i32, i32
  }
  func.func @transform_2(%arg0: i32) -> (i32, i32, i32) {
    %c0_i32 = arith.constant 0 : i32
    %c0_i32_0 = arith.constant 0 : i32
    %c0_i32_1 = arith.constant 0 : i32
    return %arg0, %c0_i32, %c0_i32_0 : i32, i32, i32
  }
}

</mosaic_0001>

<llo_original>
// kernel: tpu_custom_call.1
$region0: #{tpu_custom_call.1}
  #allocation0 [shape = 'u32[]', space=smem, size = 0x4, offset = 0x4, fixed_abs, tag = 'smem constant byte address 0x4 - core index']
  #allocation1 [shape = 'u32[72,128]{1,0:T(1,128)}', space=vmem, size = 0x9000, scoped, tag = 'internal scratch']
  %s0 = inlined_call_operand.hbm [shape: f32[2,1,32], index: 0, kind: input, shape index: {}]
  %s1 = inlined_call_operand.hbm [shape: f32[2,8,32], index: 1, kind: input, shape index: {}]
  %s2 = inlined_call_operand.hbm [shape: f32[2,1,8], index: 2, kind: output, shape index: {}]
  %s3 = sld [smem:[#allocation0]]
  $region49: #{tpu_custom_call.1} parent=0
    _
  %s5 = ssub.s32 1, %s3
  %s6 = scalar_select 0, %s5, %s3
  $region1: #{tpu_custom_call.1} parent=0
    #allocation2 [shape = 'u8[1024]{0}', space=vmem, size = 0x400, scoped, tag = 'input window, operand 0']
    #allocation3 [shape = 's32[2]{0}', space=sflag, size = 0x8, scoped, tag = 'scoped memory for tpu_custom_call.1']
    #allocation4 [shape = 's32[2]{0}', space=sflag, size = 0x8, scoped, tag = 'scoped memory for tpu_custom_call.1']
    #allocation5 [shape = 'u8[8192]{0}', space=vmem, size = 0x2000, scoped, tag = 'input window, operand 1']
    #allocation6 [shape = 's32[2]{0}', space=sflag, size = 0x8, scoped, tag = 'scoped memory for tpu_custom_call.1']
    #allocation7 [shape = 'u8[1024]{0}', space=vmem, size = 0x400, scoped, tag = 'output window, operand 0']
    %7 = vsyncpa [#allocation3], 0
    %s8 = scalar_lea.sflag [#allocation3], 1
    %9 = vsyncpa %s8, 0
    %10 = vsyncpa [#allocation6], 0
    %s11 = scalar_lea.sflag [#allocation6], 1
    %12 = vsyncpa %s11, 0
    %13 = vsyncpa [#allocation4], 0
    %s14 = scalar_lea.sflag [#allocation4], 1
    %15 = vsyncpa %s14, 0
    loop: start=0, step=1, limit=4
    $region2: #{tpu_custom_call.1} parent=1 // loop_pre_header
      _
    $region3: #{tpu_custom_call.1} parent=1 // loop_header
      %s17 = sphi 0, %s21
      %p18 = scmp.ge.s32.totalorder %s17, 4
      %s27 = sphi 0, %s29
      %s30 = sphi 0, %s27
      %s31 = sphi 0, %s30
      %s47 = sphi 0, %s31
      %s53 = sphi 0, %s55
      %s56 = sphi 0, %s53
      %s57 = sphi 0, %s56
      %s73 = sphi 0, %s57
      %s79 = sphi 0, %s81
      %s82 = sphi 0, %s79
      %s83 = sphi 0, %s82
      %s99 = sphi 0, %s83
    $region4: #{tpu_custom_call.1} parent=1 // loop_header_branch
      %20 = sbr.rel (%p18) target = $region8
    $region5: #{tpu_custom_call.1} parent=1 // loop_body
      %s22 = ssub.s32 %s17, 1
      %s23 = ssub.s32 %s17, 2
      %s24 = sadd.s32 %s17, 1
      %s25 = ssub.s32 %s17, %s24
      %p26 = scmp.eq.s32.totalorder %s25, 0
      %s28 = sadd.s32 %s27, 1
      %s29 = scalar_select %p26, %s27, %s28
      %p32 = pneg %p26
      %p33 = scmp.eq.s32.totalorder %s17, 1
      %p34 = por %p32, %p33
      %p35 = scmp.ne.s32.totalorder %s27, %s30
      %p36 = scmp.eq.s32.totalorder %s17, 0
      %p37 = por %p35, %p36
      %p38 = scmp.ne.s32.totalorder %s27, %s30
      %p39 = scmp.eq.s32.totalorder %s22, 1
      %p40 = por %p38, %p39
      %p41 = scmp.ne.s32.totalorder %s30, %s31
      %p42 = scmp.eq.s32.totalorder %s22, 0
      %p43 = por %p41, %p42
      %p44 = scmp.ne.s32.totalorder %s30, %s31
      %p45 = scmp.eq.s32.totalorder %s23, 1
      %p46 = por %p44, %p45
      %p48 = scmp.ne.s32.totalorder %s31, %s47
      %p49 = scmp.eq.s32.totalorder %s23, 0
      %p50 = por %p48, %p49
      %s51 = ssub.s32 %s17, %s24
      %p52 = scmp.eq.s32.totalorder %s51, 0
      %s54 = sadd.s32 %s53, 1
      %s55 = scalar_select %p52, %s53, %s54
      %p58 = pneg %p52
      %p59 = scmp.eq.s32.totalorder %s17, 1
      %p60 = por %p58, %p59
      %p61 = scmp.ne.s32.totalorder %s53, %s56
      %p62 = scmp.eq.s32.totalorder %s17, 0
      %p63 = por %p61, %p62
      %p64 = scmp.ne.s32.totalorder %s53, %s56
      %p65 = scmp.eq.s32.totalorder %s22, 1
      %p66 = por %p64, %p65
      %p67 = scmp.ne.s32.totalorder %s56, %s57
      %p68 = scmp.eq.s32.totalorder %s22, 0
      %p69 = por %p67, %p68
      %p70 = scmp.ne.s32.totalorder %s56, %s57
      %p71 = scmp.eq.s32.totalorder %s23, 1
      %p72 = por %p70, %p71
      %p74 = scmp.ne.s32.totalorder %s57, %s73
      %p75 = scmp.eq.s32.totalorder %s23, 0
      %p76 = por %p74, %p75
      %s77 = ssub.s32 %s17, %s24
      %p78 = scmp.eq.s32.totalorder %s77, 0
      %s80 = sadd.s32 %s79, 1
      %s81 = scalar_select %p78, %s79, %s80
      %p84 = pneg %p78
      %p85 = scmp.eq.s32.totalorder %s17, 1
      %p86 = por %p84, %p85
      %p87 = scmp.ne.s32.totalorder %s79, %s82
      %p88 = scmp.eq.s32.totalorder %s17, 0
      %p89 = por %p87, %p88
      %p90 = scmp.ne.s32.totalorder %s79, %s82
      %p91 = scmp.eq.s32.totalorder %s22, 1
      %p92 = por %p90, %p91
      %p93 = scmp.ne.s32.totalorder %s82, %s83
      %p94 = scmp.eq.s32.totalorder %s22, 0
      %p95 = por %p93, %p94
      %p96 = scmp.ne.s32.totalorder %s82, %s83
      %p97 = scmp.eq.s32.totalorder %s23, 1
      %p98 = por %p96, %p97
      %p100 = scmp.ne.s32.totalorder %s83, %s99
      %p101 = scmp.eq.s32.totalorder %s23, 0
      %p102 = por %p100, %p101
      %p103 = scmp.le.s32.totalorder 1, %s17
      %p104 = scmp.lt.s32.totalorder %s17, 3
      %p105 = pnand %p103, %p104
      %p106 = pneg %p105
      // Predicated region
      $region9: #{tpu_custom_call.1} parent=5 // pred_check
        _
      $region10: #{tpu_custom_call.1} parent=5 // pred_check_branch
        %108 = sbr.rel (%p105) target = $region12
      $region11: #{tpu_custom_call.1} parent=5 // pred_region
        %s109 = ssub.s32 %s17, 1
      $region12: #{tpu_custom_call.1} parent=5 // pred_fallthru
        _
      %p110 = scmp.lt.s32.totalorder %s17, 2
      // Predicated region
      $region13: #{tpu_custom_call.1} parent=5 // pred_check
        %p111 = pneg %p110
      $region14: #{tpu_custom_call.1} parent=5 // pred_check_branch
        %113 = sbr.rel (%p111) target = $region16
      $region15: #{tpu_custom_call.1} parent=5 // pred_region
        // Predicated region
        $region17: #{tpu_custom_call.1} parent=15 // pred_check
          %p114 = pneg %p37
        $region18: #{tpu_custom_call.1} parent=15 // pred_check_branch
          %116 = sbr.rel (%p114) target = $region20
        $region19: #{tpu_custom_call.1} parent=15 // pred_region
          %s117 = sand.u32 %s27, 1
          %s118 = scalar_lea.sflag [#allocation3], %s117
          %s119 = sand.u32 %s27, 1
          %s120 = scalar_lea.vmem [#allocation2], %s119
          %122 = vsyncadd %s118, 0
          %s123 = scalar_lea.hbm %s0, %s17
          %s125 = sshll.u32 %s123, 4
          %s126 = int_to_ptr.hbm [resolvable:$true] %s125
          %s127 = sshll.u32 %s120, 4
          %s128 = int_to_ptr.vmem [resolvable:$true] %s127
          %130 = dma.hbm_to_vmem [thread:$0]  %s126, 16, %s128, %s118
        $region20: #{tpu_custom_call.1} parent=15 // pred_fallthru
          _
        // Predicated region
        $region21: #{tpu_custom_call.1} parent=15 // pred_check
          %p131 = pneg %p63
        $region22: #{tpu_custom_call.1} parent=15 // pred_check_branch
          %133 = sbr.rel (%p131) target = $region24
        $region23: #{tpu_custom_call.1} parent=15 // pred_region
          %s134 = sand.u32 %s53, 1
          %s135 = scalar_lea.sflag [#allocation6], %s134
          %s136 = sand.u32 %s53, 1
          %s137 = smul.addr %s136, 8
          %s138 = scalar_lea.vmem [#allocation5], %s137
          %140 = vsyncadd %s135, 0
          %s141 = smul.addr %s17, 8
          %s142 = scalar_lea.hbm %s1, %s141
          %s144 = sshll.u32 %s142, 4
          %s145 = int_to_ptr.hbm [resolvable:$true] %s144
          %s146 = sshll.u32 %s138, 4
          %s147 = int_to_ptr.vmem [resolvable:$true] %s146
          %149 = dma.hbm_to_vmem [thread:$0]  %s145, 128, %s147, %s135
        $region24: #{tpu_custom_call.1} parent=15 // pred_fallthru
          _
      $region16: #{tpu_custom_call.1} parent=5 // pred_fallthru
        _
      %p150 = scmp.le.s32.totalorder 1, %s17
      %p151 = scmp.lt.s32.totalorder %s17, 3
      %p152 = pnand %p150, %p151
      %p153 = pneg %p152
      // Predicated region
      $region25: #{tpu_custom_call.1} parent=5 // pred_check
        _
      $region26: #{tpu_custom_call.1} parent=5 // pred_check_branch
        %155 = sbr.rel (%p152) target = $region28
      $region27: #{tpu_custom_call.1} parent=5 // pred_region
        %s156 = ssub.s32 %s17, 1
        %s157 = sand.u32 %s30, 1
        %s158 = scalar_lea.sflag [#allocation3], %s157
        %s159 = sand.u32 %s30, 1
        %s160 = scalar_lea.vmem [#allocation2], %s159
        // Predicated region
        $region29: #{tpu_custom_call.1} parent=27 // pred_check
          %p161 = pneg %p43
        $region30: #{tpu_custom_call.1} parent=27 // pred_check_branch
          %163 = sbr.rel (%p161) target = $region32
        $region31: #{tpu_custom_call.1} parent=27 // pred_region
          %165 = dma.done %s158, 16
        $region32: #{tpu_custom_call.1} parent=27 // pred_fallthru
          _
        %s166 = sand.u32 %s56, 1
        %s167 = scalar_lea.sflag [#allocation6], %s166
        %s168 = sand.u32 %s56, 1
        %s169 = smul.addr %s168, 8
        %s170 = scalar_lea.vmem [#allocation5], %s169
        // Predicated region
        $region33: #{tpu_custom_call.1} parent=27 // pred_check
          %p171 = pneg %p69
        $region34: #{tpu_custom_call.1} parent=27 // pred_check_branch
          %173 = sbr.rel (%p171) target = $region36
        $region35: #{tpu_custom_call.1} parent=27 // pred_region
          %175 = dma.done %s167, 128
        $region36: #{tpu_custom_call.1} parent=27 // pred_fallthru
          _
        %s176 = sand.u32 %s30, 1
        %s177 = scalar_lea.sflag [#allocation3], %s176
        %s178 = sand.u32 %s30, 1
        %s179 = scalar_lea.vmem [#allocation2], %s178
        %p180 = pneg %p43
        %p181 = pneg %p40
        %s182 = sand.u32 %s56, 1
        %s183 = scalar_lea.sflag [#allocation6], %s182
        %s184 = sand.u32 %s56, 1
        %s185 = smul.addr %s184, 8
        %s186 = scalar_lea.vmem [#allocation5], %s185
        %p187 = pneg %p69
        %p188 = pneg %p66
        %p189 = pneg %p95
        %p190 = pneg %p92
        %s191 = sand.u32 %s82, 1
        %s192 = scalar_lea.sflag [#allocation4], %s191
        %s193 = sand.u32 %s82, 1
        %s194 = scalar_lea.vmem [#allocation7], %s193
        %v195 = vld [vmem:[%s160] sm:$0x1]
        %v196 = vld [vmem:[%s170] sm:$0xff]
        %vm197 = vcmask 261120
        %v199 = vsel %vm197, %v195, 0
        %v202 = vsel %vm197, %v196, 0
        %204 = vmatpush.xpose.msra.mxu0 0.0
        %205 = vmatpush.xpose.msra.mxu0 0.0
        %206 = vmatpush.xpose.msra.mxu0 0.0
        %207 = vmatpush.xpose.msra.mxu0 0.0
        %208 = vmatpush.xpose.msra.mxu0 0.0
        %209 = vmatpush.xpose.msra.mxu0 0.0
        %210 = vmatpush.xpose.msra.mxu0 0.0
        %211 = vmatpush.xpose.msra.mxu0 0.0
        %212 = vmatpush.xpose.msra.mxu0 0.0
        %213 = vmatpush.xpose.msra.mxu0 0.0
        %214 = vmatpush.xpose.msra.mxu0 0.0
        %215 = vmatpush.xpose.msra.mxu0 0.0
        %216 = vmatpush.xpose.msra.mxu0 0.0
        %217 = vmatpush.xpose.msra.mxu0 0.0
        %218 = vmatpush.xpose.msra.mxu0 0.0
        %219 = vmatpush.xpose.msra.mxu0 %v202
        %220 = vmatmul.f32.gmra.mxu0 %v199
        %v221 = vpop.f32.mrf.mxu0
        %v222 = vadd.f32 0.0, %v221
        %223 = vdwg.mxu0
        %vm224 = vcmask 57344
        %v225 = vsel %vm224, %v222, -inf
        %226 = vmax.xlane.f32.xlu0 %v225
        %v227 = vpop.xlane.xlu0 %226
        %v228 = vsub.f32 %v222, %v227
        %v229 = vmul.f32 %v228, 1.442695
        %v230 = vpow.pop %v229
        %v231 = vsel %vm224, %v230, 0.0
        %232 = vadd.xlane.f32.xlu0 %v231
        %v233 = vpop.xlane.xlu0 %232
        %v234 = vrcp.pop %v233
        %v235 = vmul.f32 %v233, %v234
        %v236 = vsub.f32 1.0, %v235
        %v237 = vmul.f32 %v234, %v236
        %v238 = vadd.f32 %v234, %v237
        %vm239 = vweird.f32 %v233
        %vm240 = vweird.f32 %v234
        %vm241 = vmor %vm239, %vm240
        %v242 = vsel %vm241, %v234, %v238
        %v243 = vand.u32 2147483647, %v233
        %vm244 = vcmp.eq.f32.partialorder %v243, 8.507059e+37
        %v245 = vand.u32 %v233, 2147483648
        %v246 = vor.u32 1.1754944e-38, %v245
        %v247 = vsel %vm244, %v246, %v242
        %v248 = vmul.f32 %v230, %v247
        %249 = vst.msk [vmem:[%s194] sm:$0x1] %vm224, %v248
        %s250 = sand.u32 %s82, 1
        %s251 = scalar_lea.sflag [#allocation4], %s250
        %s252 = sand.u32 %s82, 1
        %s253 = scalar_lea.vmem [#allocation7], %s252
        // Predicated region
        $region37: #{tpu_custom_call.1} parent=27 // pred_check
          %p254 = pneg %p92
        $region38: #{tpu_custom_call.1} parent=27 // pred_check_branch
          %256 = sbr.rel (%p254) target = $region40
        $region39: #{tpu_custom_call.1} parent=27 // pred_region
          %258 = vsyncadd %s251, 0
          %s259 = scalar_lea.hbm %s2, %s22
          %s261 = sshll.u32 %s253, 4
          %s262 = int_to_ptr.vmem [resolvable:$true] %s261
          %s263 = sshll.u32 %s259, 4
          %s264 = int_to_ptr.hbm [resolvable:$true] %s263
          %266 = dma.vmem_to_hbm [thread:$0]  %s262, 16, %s264, %s251
        $region40: #{tpu_custom_call.1} parent=27 // pred_fallthru
          _
      $region28: #{tpu_custom_call.1} parent=5 // pred_fallthru
        _
      %p267 = scmp.le.s32.totalorder 2, %s17
      // Predicated region
      $region41: #{tpu_custom_call.1} parent=5 // pred_check
        %p268 = pneg %p267
      $region42: #{tpu_custom_call.1} parent=5 // pred_check_branch
        %270 = sbr.rel (%p268) target = $region44
      $region43: #{tpu_custom_call.1} parent=5 // pred_region
        %s271 = ssub.s32 %s17, 2
        // Predicated region
        $region45: #{tpu_custom_call.1} parent=43 // pred_check
          %p272 = pneg %p98
        $region46: #{tpu_custom_call.1} parent=43 // pred_check_branch
          %274 = sbr.rel (%p272) target = $region48
        $region47: #{tpu_custom_call.1} parent=43 // pred_region
          %s275 = sand.u32 %s83, 1
          %s276 = scalar_lea.sflag [#allocation4], %s275
          %s277 = sand.u32 %s83, 1
          %s278 = scalar_lea.vmem [#allocation7], %s277
          %280 = dma.done %s276, 16
        $region48: #{tpu_custom_call.1} parent=43 // pred_fallthru
          _
      $region44: #{tpu_custom_call.1} parent=5 // pred_fallthru
        _
    $region6: #{tpu_custom_call.1} parent=1 // loop_footer
      %s21 = sadd.s32 1, %s17
    $region7: #{tpu_custom_call.1} parent=1 // loop_footer_branch
      %16 = sbr.rel target = $region3
    $region8: #{tpu_custom_call.1} parent=1 // loop_exit
      _
    %281 = vsyncpa [#allocation3], 1
    %s282 = scalar_lea.sflag [#allocation3], 1
    %283 = vsyncpa %s282, 1
    %284 = vsyncpa [#allocation6], 1
    %s285 = scalar_lea.sflag [#allocation6], 1
    %286 = vsyncpa %s285, 1
    %287 = vsyncpa [#allocation4], 1
    %s288 = scalar_lea.sflag [#allocation4], 1
    %289 = vsyncpa %s288, 1

</llo_original>
